<compile_context>
chip_gen: v6e
topology: v6e:2x2x1
jax: 0.10.0
libtpu: 0.0.40
codegen_flags: <defaults>
</compile_context>

<pallas_src>
import functools

import jax
import jax.numpy as jnp
from jax.experimental import pallas as pl
from jax.experimental.pallas import tpu as pltpu

# ~4 MiB blocks; 40 MiB scoped-VMEM limit keeps 4 MiB x 2 buffers x (in+out)
# legal on v5e (128 MiB physical) and comfortably under v7x's 64 MiB physical.
_TARGET_BLOCK_BYTES = 4 * 1024 * 1024
_VMEM_LIMIT_BYTES = 40 * 1024 * 1024
_MAX_COLS = 16384


# --------------------------------------------------------------------------
# Kernels
# --------------------------------------------------------------------------
def _zero_mul_kernel(x_ref, o_ref):
    # Exact `x.mul(0.0)` semantics: keeps dtype, propagates NaN and -0.0.
    o_ref[...] = x_ref[...] * 0.0


def _zeros_kernel(o_ref):
    # Write-only fast path: no input read at all (half the HBM traffic).
    o_ref[...] = jnp.zeros(o_ref.shape, o_ref.dtype)


def _zero_mul_wsub_kernel(x_ref, o_ref, *, stride):
    # Fused stride>1 path: the block holds `tnc` copies of one (strided) H row.
    # Do the W ::stride selection in-register (take element 0 of each stride
    # group) and multiply by zero -> exact mul(0.0) semantics preserved.
    x = x_ref[...]                                    # (tnc, 1, W)
    tnc, _, w = x.shape
    w_out = w // stride
    picked = x.reshape(tnc, w_out, stride)[:, :, 0]   # every stride-th column
    o_ref[...] = (picked * 0.0)[:, None, :]           # (tnc, 1, W_out)


# --------------------------------------------------------------------------
# Tiling helpers
# --------------------------------------------------------------------------
def _lane_dense_2d(total, max_cols=_MAX_COLS):
    """Factor `total` as rows*cols with cols a multiple of 128 lanes.

    Prefers the largest divisor of `total` that is a multiple of 128 (full
    unmasked 8x128 stores).  If none exists, pad the flattened length to the
    next multiple of 128 (caller slices the tail off) rather than accepting
    masked partial stores on every row.  Returns (rows, cols, pad).
    """
    best_128 = None
    for c in range(128, min(total, max_cols) + 1, 128):
        if total % c == 0:
            best_128 = c
    if best_128 is not None:
        return total // best_128, best_128, 0
    padded = pl.cdiv(total, 128) * 128
    cols = 128
    for c in range(128, min(padded, max_cols) + 1, 128):
        if padded % c == 0:
            cols = c
    return padded // cols, cols, padded - total


def _pick_row_tile(rows, cols, itemsize, target_bytes=_TARGET_BLOCK_BYTES):
    """Sublane tile: ~target_bytes blocks, sublane-pack aligned, and >=2 grid
    steps whenever possible so both v7x TensorCores get work."""
    sub = 8 * max(1, 4 // itemsize)        # 8 (f32) / 16 (bf16) / 32 (int8/fp8)
    row_bytes = cols * itemsize
    if rows * row_bytes <= target_bytes:
        if rows >= 2 * sub:
            half = ((rows + 1) // 2 + sub - 1) // sub * sub
            if half < rows:
                return half                 # 2 (or 3) blocks instead of 1
        return rows                         # single block == full extent
    t = (target_bytes // row_bytes) // sub * sub
    return min(rows, max(sub, t))


def _compiler_params(n_grid_axes):
    return pltpu.CompilerParams(
        dimension_semantics=("parallel",) * n_grid_axes,
        vmem_limit_bytes=_VMEM_LIMIT_BYTES)


# --------------------------------------------------------------------------
# Launchers
# --------------------------------------------------------------------------
def _zero_exact_flat(x):
    """Exact mul(0.0): tiled, lane-dense, read+write elementwise kernel."""
    orig_shape = x.shape
    total = x.size
    itemsize = x.dtype.itemsize
    rows, cols, pad = _lane_dense_2d(total)
    tile_rows = _pick_row_tile(rows, cols, itemsize)
    spec = pl.BlockSpec((tile_rows, cols), lambda i: (i, 0))

    flat = x.reshape(-1)
    if pad:
        # Rare fallback (x.size has no 128-multiple divisor): pad so stores
        # stay lane-dense; tail is sliced off below.
        flat = jnp.pad(flat, (0, pad))
    x2 = flat.reshape(rows, cols)

    out2 = pl.pallas_call(
        _zero_mul_kernel,
        out_shape=jax.ShapeDtypeStruct((rows, cols), x.dtype),
        grid=(pl.cdiv(rows, tile_rows),),
        in_specs=[spec],
        out_specs=spec,
        compiler_params=_compiler_params(1),
        cost_estimate=pl.CostEstimate(
            flops=total, transcendentals=0,
            bytes_accessed=2 * rows * cols * itemsize),
    )(x2)

    out_flat = out2.reshape(-1)
    if pad:
        out_flat = out_flat[:total]
    return out_flat.reshape(orig_shape)


def _zeros_fast(shape, dtype):
    """Opt-in fast path: write-only kernel, no input read."""
    dtype = jnp.dtype(dtype)
    total = 1
    for d in shape:
        total *= int(d)
    rows, cols, pad = _lane_dense_2d(total)
    if pad:
        # A pure-zeros output gains nothing from a padded kernel launch.
        return jnp.zeros(shape, dtype)
    itemsize = dtype.itemsize
    tile_rows = _pick_row_tile(rows, cols, itemsize)
    out2 = pl.pallas_call(
        _zeros_kernel,
        out_shape=jax.ShapeDtypeStruct((rows, cols), dtype),
        grid=(pl.cdiv(rows, tile_rows),),
        out_specs=pl.BlockSpec((tile_rows, cols), lambda i: (i, 0)),
        compiler_params=_compiler_params(1),
        cost_estimate=pl.CostEstimate(
            flops=0, transcendentals=0,
            bytes_accessed=rows * cols * itemsize),
    )()
    return out2.reshape(shape)


def _zero_stride_fused(x, stride):
    """stride>1 exact path with the spatial subsample fused into the kernel."""
    n, c, h, w = x.shape
    nc = n * c
    h_out = pl.cdiv(h, stride)
    w_out = w // stride                 # caller guarantees w % stride == 0
    itemsize = x.dtype.itemsize
    x3 = x.reshape(nc, h, w)

    # Largest divisor of NC whose (tnc, 1, W) input block stays <= ~2 MiB.
    max_rows = max(1, (_TARGET_BLOCK_BYTES // 2) // (w * itemsize))
    tnc = 1
    for d in range(1, nc + 1):
        if nc % d == 0 and d <= max_rows:
            tnc = d

    out3 = pl.pallas_call(
        functools.partial(_zero_mul_wsub_kernel, stride=stride),
        out_shape=jax.ShapeDtypeStruct((nc, h_out, w_out), x.dtype),
        grid=(nc // tnc, h_out),
        in_specs=[pl.BlockSpec((tnc, 1, w),
                               lambda i, hh: (i, hh * stride, 0))],
        out_specs=pl.BlockSpec((tnc, 1, w_out),
                               lambda i, hh: (i, hh, 0)),
        compiler_params=_compiler_params(2),
        cost_estimate=pl.CostEstimate(
            flops=nc * h_out * w_out, transcendentals=0,
            bytes_accessed=nc * h_out * (w + w_out) * itemsize),
    )(x3)
    return out3.reshape(n, c, h_out, w_out)


# --------------------------------------------------------------------------
# Public entry points
# --------------------------------------------------------------------------
def zero_forward(x, stride, *, fast_path=False, fuse_stride=True):
    """Forward pass of `Zero` (NCHW input when stride != 1).

    fast_path:   opt-in (default OFF) write-only kernel — skips the input read
                 entirely (~2x less HBM traffic; for stride>1 also removes the
                 slice pre-pass) at the cost of NaN / -0.0 propagation.
    fuse_stride: for stride > 1, fuse the ::stride subsample into the kernel
                 (DMA only the needed H rows, select W columns in-register)
                 instead of an XLA strided-slice pre-pass.
    """
    if not jnp.issubdtype(x.dtype, jnp.floating):
        # torch's out-of-place mul(0.0) promotes int/bool tensors to the
        # default float dtype; mirror that so kernel dtypes stay consistent.
        x = x.astype(jnp.float32)

    if stride == 1:
        if fast_path:
            return _zeros_fast(x.shape, x.dtype)
        return _zero_exact_flat(x)

    n, c, h, w = x.shape
    h_out = pl.cdiv(h, stride)
    w_out = pl.cdiv(w, stride)

    if fast_path:
        return _zeros_fast((n, c, h_out, w_out), x.dtype)

    if fuse_stride and w % stride == 0:
        try:
            out = _zero_stride_fused(x, stride)
            # Block here so a Mosaic lowering/runtime rejection of the in-kernel
            # lane subsample surfaces inside this try (eager feature-detect).
            return jax.block_until_ready(out)
        except Exception:
            # TODO(synk): fused W (lane) subsample not lowered on this Mosaic
            # version; fall back to the XLA slice + lane-dense kernel below.
            pass

    return _zero_exact_flat(x[:, :, ::stride, ::stride])


class Zero:
    """Drop-in equivalent of the PyTorch `Zero` module."""

    def __init__(self, stride):
        self.stride = stride

    def __call__(self, x, **kwargs):
        return zero_forward(x, self.stride, **kwargs)


# --------------------------------------------------------------------------
# Self-test
# --------------------------------------------------------------------------
if __name__ == "__main__":
    key = jax.random.PRNGKey(0)
    x = jax.random.normal(key, (2, 4, 16, 16), dtype=jnp.float32)

    # stride == 2, exact semantics (default: fused subsample, safe fallback)
    out_s2 = jax.block_until_ready(zero_forward(x, 2))
    expected_s2 = x[:, :, ::2, ::2] * 0.0
    assert out_s2.shape == (2, 4, 8, 8), out_s2.shape
    assert out_s2.dtype == x.dtype
    assert jnp.array_equal(out_s2, expected_s2)

    # stride == 2, explicitly exercise the non-fused (slice + kernel) path
    out_s2_nf = jax.block_until_ready(zero_forward(x, 2, fuse_stride=False))
    assert out_s2_nf.shape == (2, 4, 8, 8)
    assert jnp.array_equal(out_s2_nf, expected_s2)

    # stride == 1, exact semantics
    out_s1 = jax.block_until_ready(Zero(1)(x))
    assert out_s1.shape == x.shape
    assert out_s1.dtype == x.dtype
    assert jnp.array_equal(out_s1, x * 0.0)

    # opt-in write-only fast path (zeros only, no input read)
    out_f1 = jax.block_until_ready(zero_forward(x, 1, fast_path=True))
    assert out_f1.shape == x.shape and out_f1.dtype == x.dtype
    assert jnp.array_equal(out_f1, jnp.zeros_like(x))
    out_f2 = jax.block_until_ready(zero_forward(x, 2, fast_path=True))
    assert out_f2.shape == (2, 4, 8, 8) and out_f2.dtype == x.dtype
    assert jnp.array_equal(out_f2, jnp.zeros((2, 4, 8, 8), x.dtype))

    print("KERNEL_OK")
</pallas_src>

<mosaic_0001>
module attributes {stable_mosaic.version = 11 : i64} {
  func.func @_zero_mul_kernel(%arg0: i32, %arg1: memref<1x512xf32, #tpu.memory_space<vmem>>, %arg2: memref<1x512xf32, #tpu.memory_space<vmem>>) attributes {dimension_semantics = [#tpu.dimension_semantics<parallel>], iteration_bounds = array<i64: 1>, scalar_prefetch = 0 : i64, scratch_operands = 0 : i64, tpu.core_type = #tpu.core_type<tc>, window_params = [{transform_indices = @transform_0, window_bounds = array<i64: 1, 512>}, {transform_indices = @transform_1, window_bounds = array<i64: 1, 512>}]} {
    %c0 = arith.constant 0 : index
    %c0_0 = arith.constant 0 : index
    %0 = vector.load %arg1[%c0, %c0_0] : memref<1x512xf32, #tpu.memory_space<vmem>>, vector<1x512xf32>
    %cst = arith.constant 0.000000e+00 : f32
    %1 = vector.broadcast %cst : f32 to vector<1x512xf32>
    %2 = arith.mulf %0, %1 : vector<1x512xf32>
    %c0_1 = arith.constant 0 : index
    %c0_2 = arith.constant 0 : index
    %3 = vector.load %arg2[%c0_1, %c0_2] : memref<1x512xf32, #tpu.memory_space<vmem>>, vector<1x512xf32>
    tpu.vector_store %arg2[%c0_1, %c0_2], %2 {strides = array<i32>} : memref<1x512xf32, #tpu.memory_space<vmem>>, vector<1x512xf32>,
    return
  }
  func.func @transform_0(%arg0: i32) -> (i32, i32) {
    %c0_i32 = arith.constant 0 : i32
    %c0_i32_0 = arith.constant 0 : i32
    return %arg0, %c0_i32 : i32, i32
  }
  func.func @transform_1(%arg0: i32) -> (i32, i32) {
    %c0_i32 = arith.constant 0 : i32
    %c0_i32_0 = arith.constant 0 : i32
    return %arg0, %c0_i32 : i32, i32
  }
}

</mosaic_0001>

<llo_original>
// kernel: tpu_custom_call.1
$region0: #{tpu_custom_call.1}
  #allocation0 [shape = 'u32[]', space=smem, size = 0x4, offset = 0x4, fixed_abs, tag = 'smem constant byte address 0x4 - core index']
  #allocation1 [shape = 'u32[144,128]{1,0:T(1,128)}', space=vmem, size = 0x12000, scoped, tag = 'internal scratch']
  %s0 = inlined_call_operand.hbm [shape: f32[1,512], index: 0, kind: input, shape index: {}]
  %s1 = inlined_call_operand.hbm [shape: f32[1,512], index: 1, kind: output, shape index: {}]
  %s2 = sld [smem:[#allocation0]]
  $region18: #{tpu_custom_call.1} parent=0
    _
  %s4 = ssub.s32 1, %s2
  %s5 = scalar_select 0, %s4, %s2
  $region1: #{tpu_custom_call.1} parent=0
    #allocation2 [shape = 'u8[2048]{0}', space=vmem, size = 0x800, scoped, tag = 'input window, operand 0, single buffered']
    #allocation3 [shape = 's32[1]{0}', space=sflag, size = 0x4, scoped, tag = 'scoped memory for tpu_custom_call.1']
    #allocation4 [shape = 's32[1]{0}', space=sflag, size = 0x4, scoped, tag = 'scoped memory for tpu_custom_call.1']
    #allocation5 [shape = 'u8[2048]{0}', space=vmem, size = 0x800, scoped, tag = 'output window, operand 0, single buffered']
    %6 = vsyncpa [#allocation3], 0
    %7 = vsyncpa [#allocation4], 0
    // Predicated region
    $region2: #{tpu_custom_call.1} parent=1 // pred_check
      _
    $region3: #{tpu_custom_call.1} parent=1 // pred_check_branch
      %9 = sbr.rel (0) target = $region5
    $region4: #{tpu_custom_call.1} parent=1 // pred_region
      %s11 = ssub.s32 64, 64
      %12 = vsyncadd [#allocation3], %s11
      %s14 = sshll.u32 [#allocation2], 4
      %s15 = int_to_ptr.vmem [resolvable:$true] %s14
      %17 = dma.hbm_to_vmem [thread:$0]  %s0, 64, %s15, [#allocation3]
    $region5: #{tpu_custom_call.1} parent=1 // pred_fallthru
      _
    // Predicated region
    $region6: #{tpu_custom_call.1} parent=1 // pred_check
      _
    $region7: #{tpu_custom_call.1} parent=1 // pred_check_branch
      %19 = sbr.rel (0) target = $region9
    $region8: #{tpu_custom_call.1} parent=1 // pred_region
      %20 = dma.done [#allocation3], 64
    $region9: #{tpu_custom_call.1} parent=1 // pred_fallthru
      _
    %v21 = vld [vmem:[#allocation2] sm:$0xf]
    %v22 = vmul.f32 %v21, 0.0
    %v23 = vlaneseq
    %vm24 = vcmp.ge.s32.totalorder %v23, 0
    %vm25 = vcmp.lt.s32.totalorder %v23, 512
    %vm26 = vmand %vm24, %vm25
    %27 = vst.msk [vmem:[#allocation5] sm:$0xf] %vm26, %v22
    // Predicated region
    $region10: #{tpu_custom_call.1} parent=1 // pred_check
      _
    $region11: #{tpu_custom_call.1} parent=1 // pred_check_branch
      %29 = sbr.rel (0) target = $region13
    $region12: #{tpu_custom_call.1} parent=1 // pred_region
      %s31 = ssub.s32 64, 64
      %32 = vsyncadd [#allocation4], %s31
      %s34 = sshll.u32 [#allocation5], 4
      %s35 = int_to_ptr.vmem [resolvable:$true] %s34
      %37 = dma.vmem_to_hbm [thread:$0]  %s35, 64, %s1, [#allocation4]
    $region13: #{tpu_custom_call.1} parent=1 // pred_fallthru
      _
    // Predicated region
    $region14: #{tpu_custom_call.1} parent=1 // pred_check
      _
    $region15: #{tpu_custom_call.1} parent=1 // pred_check_branch
      %39 = sbr.rel (0) target = $region17
    $region16: #{tpu_custom_call.1} parent=1 // pred_region
      %40 = dma.done [#allocation4], 64
    $region17: #{tpu_custom_call.1} parent=1 // pred_fallthru
      _
    %41 = vsyncpa [#allocation3], 1
    %42 = vsyncpa [#allocation4], 1

</llo_original>
